<compile_context>
chip_gen: v7x
topology: tpu7x:2x2x1
jax: 0.10.0
libtpu: 0.0.40
codegen_flags: <defaults>
</compile_context>

<pallas_src>
import functools
import math

import jax
import jax.numpy as jnp
from jax import lax
from jax.experimental import pallas as pl
from jax.experimental.pallas import tpu as pltpu

REP_DIM = 5
VMEM_LIMIT = 32 * 1024 * 1024      # explicit scoped-VMEM request (v5e default ~16 MiB)


def _round_up(x, m):
    return ((x + m - 1) // m) * m


# ---------------------------------------------------------------------------
# pltpu.roll sign convention probe
# ---------------------------------------------------------------------------
# The fused conv kernel needs   result[..., l] = x[..., l + q]   (cyclic).
# With jnp.roll semantics (out[i] = in[i - shift]) that is shift = -q (mod n).
# Probe the compiled convention once at import so a convention difference in
# the Mosaic lowering can never silently corrupt outputs.
def _roll_probe_kernel(x_ref, o_ref):
    o_ref[...] = pltpu.roll(x_ref[...], shift=1, axis=1)


def _probe_roll_is_jnp_like():
    x = lax.broadcasted_iota(jnp.float32, (8, 128), 1)
    y = pl.pallas_call(
        _roll_probe_kernel,
        out_shape=jax.ShapeDtypeStruct((8, 128), jnp.float32),
    )(x)
    # jnp.roll(x, 1, axis=1) puts old column 0 at column 1.
    return bool(jax.device_get(y)[0, 1] == 0.0)


_ROLL_IS_JNP_LIKE = _probe_roll_is_jnp_like()


def _shift_up_lanes(x, q):
    """result[..., l] = x[..., (l + q) % n] along the lane (last) axis."""
    n = x.shape[-1]
    shift = (n - q) % n if _ROLL_IS_JNP_LIKE else q % n
    return pltpu.roll(x, shift=shift, axis=x.ndim - 1)


# ---------------------------------------------------------------------------
# Pallas kernels
# ---------------------------------------------------------------------------
def _conv_fused_kernel(w_ref, b_ref, s_ref, o_ref, *, taps, cout_pad, act):
    """Fused stride-decomposed conv block.

    w_ref: (taps*cout_pad, K1) bf16 -- per-tap weight slabs stacked on rows.
    b_ref: (cout_pad, 1) f32 bias.
    s_ref: (K1, bn) bf16 row-stacked input; lanes = (row, padded width) with
           >= taps-1 slack columns per row segment, so the tap shifts never
           leak across rows (wrapped lanes land only in cropped columns).
    o_ref: (Cout, bn) output block.

    One MXU matmul per block; the taps-1 lane shifts go to the XLU via
    pltpu.roll (no f32 concat-of-slices VMEM copies).
    """
    u = jnp.dot(w_ref[...], s_ref[...], preferred_element_type=jnp.float32)
    acc = u[0:cout_pad, :]
    for qx in range(1, taps):
        slab = u[qx * cout_pad:(qx + 1) * cout_pad, :]
        acc = acc + _shift_up_lanes(slab, qx)
    acc = acc + b_ref[...]
    if act == "relu":
        acc = jnp.maximum(acc, 0.0)
    elif act == "sigmoid":
        acc = 1.0 / (1.0 + jnp.exp(-acc))            # exact sigmoid, f32
    cout = o_ref.shape[0]
    o_ref[...] = acc[0:cout, :].astype(o_ref.dtype)


def _gemm_bias_act_kernel(w_ref, b_ref, p_ref, o_ref, *, act):
    """o = act(W @ P + b); the large spatial axis is the lane axis."""
    acc = jnp.dot(w_ref[...], p_ref[...], preferred_element_type=jnp.float32)
    acc = acc + b_ref[...]
    if act == "relu":
        acc = jnp.maximum(acc, 0.0)
    elif act == "sigmoid":
        acc = 1.0 / (1.0 + jnp.exp(-acc))            # exact sigmoid, f32
    o_ref[...] = acc.astype(o_ref.dtype)


def _maxpool_kernel(x_ref, o_ref, *, win):
    """Separable stride-1 window max over a (Cb, H, W) slab resident in VMEM:
    win-1 lane maxima then win-1 sublane maxima (2*(win-1) maxima instead of
    win^2-1 two-dimensional shifted slices)."""
    _, H, W = x_ref.shape
    Hm, Wm = H - win + 1, W - win + 1
    mx = x_ref[:, :, 0:Wm]
    for dx in range(1, win):
        mx = jnp.maximum(mx, x_ref[:, :, dx:dx + Wm])
    m = mx[:, 0:Hm, :]
    for dy in range(1, win):
        m = jnp.maximum(m, mx[:, dy:dy + Hm, :])
    o_ref[...] = m


# ---------------------------------------------------------------------------
# Pallas wrappers
# ---------------------------------------------------------------------------
def conv2d_fused(x, w, b, stride, act="relu", out_dtype=jnp.bfloat16,
                 rows_per_block=None):
    """PyTorch Conv2d (no padding) with im2col fused into the kernel.

    The stride is removed with a space-to-depth phase decomposition
    (k = m*stride taps per axis); the qy taps are row-stacked into the GEMM K
    axis in glue and the qx taps are resolved inside the kernel with lane
    shifts, so glue traffic is ~m x the input instead of k*k x (im2col).
    Requires stride | k, H, W, (H-k), (W-k).
    """
    Cout, Cin, k, _ = w.shape
    B, _, H, W = x.shape
    s = stride
    assert k % s == 0 and H % s == 0 and W % s == 0
    assert (H - k) % s == 0 and (W - k) % s == 0
    m = k // s
    Hp, Wp = H // s, W // s
    Ho, Wo = (H - k) // s + 1, (W - k) // s + 1
    Cph = Cin * s * s
    K1 = Cph * m
    W1 = _round_up(max(Wp, Wo + m - 1), 128)       # lane-aligned padded row width
    cout_pad = _round_up(Cout, 8)                  # sublane-aligned weight slabs

    # -- glue: space-to-depth (c' = (ci, py, px)), bf16 ----------------------
    xb = x.astype(jnp.bfloat16)
    xp = xb.reshape(B, Cin, Hp, s, Wp, s).transpose(0, 1, 3, 5, 2, 4)
    xp = xp.reshape(B, Cph, Hp, Wp)
    # -- glue: qy row-stack; K1 rows ordered (ci, py, px, qy); cols (b, oy, j)
    S = jnp.stack([xp[:, :, qy:qy + Ho, :] for qy in range(m)], axis=2)
    S = jnp.pad(S, ((0, 0), (0, 0), (0, 0), (0, 0), (0, W1 - Wp)))
    S = S.transpose(1, 2, 0, 3, 4).reshape(K1, B * Ho * W1)

    # -- per-tap weight slabs stacked on the result-row axis: rows (qx, co) --
    wk = w.reshape(Cout, Cin, m, s, m, s).transpose(4, 0, 1, 3, 5, 2)
    wk = wk.reshape(m, Cout, K1)
    wstack = jnp.zeros((m, cout_pad, K1), jnp.float32).at[:, :Cout, :].set(wk)
    wstack = wstack.reshape(m * cout_pad, K1).astype(jnp.bfloat16)
    bpad = jnp.zeros((cout_pad, 1), jnp.float32).at[:Cout, 0].set(
        b.astype(jnp.float32))

    n_rows = B * Ho
    if rows_per_block is None:
        rows_per_block = n_rows
    # Divisor-sized blocks only: no masked tail blocks (correctness hazard and
    # wasted work), and even grids keep both v7x TensorCores busy.
    assert n_rows % rows_per_block == 0
    bn = rows_per_block * W1
    grid = n_rows // rows_per_block
    L = B * Ho * W1

    out = pl.pallas_call(
        functools.partial(_conv_fused_kernel, taps=m, cout_pad=cout_pad,
                          act=act),
        out_shape=jax.ShapeDtypeStruct((Cout, L), out_dtype),
        grid=(grid,),
        in_specs=[
            pl.BlockSpec((m * cout_pad, K1), lambda i: (0, 0)),   # resident weights
            pl.BlockSpec((cout_pad, 1), lambda i: (0, 0)),        # resident bias
            pl.BlockSpec((K1, bn), lambda i: (0, i)),             # input slab
        ],
        out_specs=pl.BlockSpec((Cout, bn), lambda i: (0, i)),
        compiler_params=pltpu.CompilerParams(
            dimension_semantics=("parallel",),
            vmem_limit_bytes=VMEM_LIMIT),
    )(wstack, bpad, S)

    out = out.reshape(Cout, B, Ho, W1)[:, :, :, :Wo]    # crop padded columns
    return out.transpose(1, 0, 2, 3)                    # (B, Cout, Ho, Wo)


def conv_gemm(wmat, bias, patches, act="none", bn=3200, out_dtype=jnp.float32):
    """act(W @ P + b); W:(Cout,K), P:(K,M) -> (Cout,M); M is the lane axis."""
    Cout, K = wmat.shape
    K2, M = patches.shape
    assert K == K2
    if M % bn or bn % 128:
        bn = M                                   # single full (lane-dense) block
    grid = M // bn
    return pl.pallas_call(
        functools.partial(_gemm_bias_act_kernel, act=act),
        out_shape=jax.ShapeDtypeStruct((Cout, M), out_dtype),
        grid=(grid,),
        in_specs=[
            pl.BlockSpec((Cout, K), lambda i: (0, 0)),            # resident weights
            pl.BlockSpec((Cout, 1), lambda i: (0, 0)),            # resident bias
            pl.BlockSpec((K, bn), lambda i: (0, i)),              # patch slab
        ],
        out_specs=pl.BlockSpec((Cout, bn), lambda i: (0, i)),
        compiler_params=pltpu.CompilerParams(
            dimension_semantics=("parallel",),
            vmem_limit_bytes=VMEM_LIMIT),
    )(wmat.astype(jnp.bfloat16),
      bias.reshape(Cout, 1).astype(jnp.float32),
      patches.astype(jnp.bfloat16))


def maxpool2d(x, win, stride, channels_per_block=None):
    """MaxPool2d(win, stride): separable stride-1 max in Pallas; the (tiny)
    strided subsample for stride > 1 stays in glue."""
    B, C, H, W = x.shape
    Hm, Wm = H - win + 1, W - win + 1
    N = B * C
    cb = channels_per_block if channels_per_block is not None else N
    if N % cb:
        cb = N
    xm = x.reshape(N, H, W)
    m = pl.pallas_call(
        functools.partial(_maxpool_kernel, win=win),
        out_shape=jax.ShapeDtypeStruct((N, Hm, Wm), x.dtype),
        grid=(N // cb,),
        in_specs=[pl.BlockSpec((cb, H, W), lambda i: (i, 0, 0))],
        out_specs=pl.BlockSpec((cb, Hm, Wm), lambda i: (i, 0, 0)),
        compiler_params=pltpu.CompilerParams(dimension_semantics=("parallel",)),
    )(xm)
    if stride != 1:
        Ho = (H - win) // stride + 1
        Wo = (W - win) // stride + 1
        m = m[:, ::stride, ::stride][:, :Ho, :Wo]
    return m.reshape(B, C, m.shape[1], m.shape[2])


def extract_patches_T(x, k):
    """Stride-1 im2col: x (B,C,H,W) -> (C*k*k, B*Ho*Wo); rows ordered (c,ky,kx)."""
    B, C, H, W = x.shape
    Ho, Wo = H - k + 1, W - k + 1
    rows = []
    for c in range(C):
        for ky in range(k):
            for kx in range(k):
                rows.append(x[:, c, ky:ky + Ho, kx:kx + Wo])
    p = jnp.stack(rows, axis=0)                  # (C*k*k, B, Ho, Wo)
    return p.reshape(C * k * k, B * Ho * Wo), (Ho, Wo)


def conv_transpose2d_subpixel(x, w, b, stride, act):
    """PyTorch ConvTranspose2d (dilation=1, k % stride == 0) via sub-pixel
    decomposition: one stride-1 GEMM with stride^2*Cout output rows instead of
    a zero-upsampled im2col.  w: (Cin, Cout, k, k)."""
    Cin, Cout, k, _ = w.shape
    assert k % stride == 0
    m = k // stride
    B, _, H, W = x.shape
    xp = jnp.pad(x, ((0, 0), (0, 0), (m - 1, m - 1), (m - 1, m - 1)))
    patches, (Ho, Wo) = extract_patches_T(xp.astype(jnp.bfloat16), m)
    wr = w.reshape(Cin, Cout, m, stride, m, stride)[:, :, ::-1, :, ::-1, :]
    wmat = wr.transpose(3, 5, 1, 0, 2, 4).reshape(stride * stride * Cout,
                                                  Cin * m * m)
    bstack = jnp.tile(b, stride * stride)
    # bn=3200 divides M=6400 exactly -> 2 even blocks (v7x), no masked tail.
    y = conv_gemm(wmat, bstack, patches, act=act, bn=3200,
                  out_dtype=jnp.float32)
    y = y.reshape(stride, stride, Cout, B, Ho, Wo)
    y = y.transpose(3, 2, 4, 0, 5, 1)             # (B, Cout, u, r, v, c)
    return y.reshape(B, Cout, Ho * stride, Wo * stride)


# ---------------------------------------------------------------------------
# Plain-XLA helpers (tiny layers, and the f32 reference used for the check)
# ---------------------------------------------------------------------------
def conv2d_lax(x, w, b, stride, act="relu"):
    y = lax.conv_general_dilated(
        x.astype(jnp.float32), w.astype(jnp.float32),
        window_strides=(stride, stride), padding="VALID",
        dimension_numbers=("NCHW", "OIHW", "NCHW"))
    y = y + b.reshape(1, -1, 1, 1)
    return jnp.maximum(y, 0.0) if act == "relu" else y


def conv_transpose2d_lax(x, w, b, stride, dilation, act="relu"):
    """PyTorch ConvTranspose2d (padding=0) expressed as a dilated forward conv."""
    Cin, Cout, k, _ = w.shape
    wflip = jnp.flip(w, (2, 3)).transpose(1, 0, 2, 3)      # (Cout, Cin, k, k)
    P = dilation * (k - 1)
    y = lax.conv_general_dilated(
        x.astype(jnp.float32), wflip.astype(jnp.float32),
        window_strides=(1, 1), padding=[(P, P), (P, P)],
        lhs_dilation=(stride, stride), rhs_dilation=(dilation, dilation),
        dimension_numbers=("NCHW", "OIHW", "NCHW"))
    y = y + b.reshape(1, -1, 1, 1)
    if act == "relu":
        y = jnp.maximum(y, 0.0)
    elif act == "sigmoid":
        y = jax.nn.sigmoid(y)
    return y


def maxpool2d_lax(x, win, stride):
    return lax.reduce_window(x, -jnp.inf, lax.max,
                             (1, 1, win, win), (1, 1, stride, stride), "VALID")


def linear(x, w, b, act="none"):
    y = x @ w.T + b
    return jnp.maximum(y, 0.0) if act == "relu" else y


# ---------------------------------------------------------------------------
# Model
# ---------------------------------------------------------------------------
def init_params(key):
    ks = iter(jax.random.split(key, 24))

    def uinit(shape, fan_in):
        bound = 1.0 / math.sqrt(fan_in)
        return jax.random.uniform(next(ks), shape, jnp.float32, -bound, bound)

    p = {}
    p["cnn1_w"] = uinit((10, 3, 10, 10), 3 * 10 * 10)
    p["cnn1_b"] = uinit((10,), 3 * 10 * 10)
    p["cnn2_w"] = uinit((5, 10, 8, 8), 10 * 8 * 8)
    p["cnn2_b"] = uinit((5,), 10 * 8 * 8)
    p["cnn3_w"] = uinit((1, 5, 5, 5), 5 * 5 * 5)
    p["cnn3_b"] = uinit((1,), 5 * 5 * 5)
    p["encode_w"] = uinit((2 * REP_DIM, 25), 25)
    p["encode_b"] = uinit((2 * REP_DIM,), 25)
    p["mean_w"] = uinit((REP_DIM, 2 * REP_DIM), 2 * REP_DIM)
    p["mean_b"] = uinit((REP_DIM,), 2 * REP_DIM)
    p["logvar_w"] = uinit((REP_DIM, 2 * REP_DIM), 2 * REP_DIM)
    p["logvar_b"] = uinit((REP_DIM,), 2 * REP_DIM)
    p["decode_w"] = uinit((25, REP_DIM), REP_DIM)
    p["decode_b"] = uinit((25,), REP_DIM)
    # ConvTranspose2d weights: PyTorch layout (Cin, Cout, k, k)
    p["d1_w"] = uinit((1, 5, 6, 6), 5 * 6 * 6)
    p["d1_b"] = uinit((5,), 5 * 6 * 6)
    p["d2_w"] = uinit((5, 10, 4, 4), 10 * 4 * 4)
    p["d2_b"] = uinit((10,), 10 * 4 * 4)
    p["d3_w"] = uinit((10, 3, 40, 40), 3 * 40 * 40)
    p["d3_b"] = uinit((3,), 3 * 40 * 40)
    return p


def image_vae_forward(params, x, noise_key, sigmoid=True):
    x = x.astype(jnp.float32)
    B = x.shape[0]

    # ---- encode_convolutions (Pallas for the big layers) -------------------
    # cnn1: 3->10, k=10, s=2 on 400x400; m=5 taps, 49 rows/block -> grid=4.
    h = conv2d_fused(x, params["cnn1_w"], params["cnn1_b"], stride=2,
                     act="relu", out_dtype=jnp.bfloat16, rows_per_block=49)
    h = maxpool2d(h, 3, 1, channels_per_block=5)          # grid=2, bf16
    # cnn2: zero-pad the 8x8/stride-3 kernel to 9x9 (and the input by one
    # row/col of zeros) -- mathematically identical -- so the fused stride
    # decomposition applies (m=3 taps) instead of a 640-slice strided im2col.
    w2 = jnp.pad(params["cnn2_w"], ((0, 0), (0, 0), (0, 1), (0, 1)))
    hp = jnp.pad(h, ((0, 0), (0, 0), (0, 1), (0, 1)))
    # whole layer is ~4 MB and HBM-bound: a single divisor block (grid=1) beats
    # splitting it (HBM bandwidth is shared between v7x cores anyway).
    h = conv2d_fused(hp, w2, params["cnn2_b"], stride=3,
                     act="relu", out_dtype=jnp.bfloat16, rows_per_block=None)
    h = maxpool2d(h, 3, 2)                                 # (1,5,31,31) bf16
    # cnn3 + pool_3 are tiny (<= 5x31x31): plain XLA beats a kernel launch.
    h = conv2d_lax(h, params["cnn3_w"], params["cnn3_b"], stride=2, act="relu")
    h = maxpool2d_lax(h, 6, 2)
    assert h.shape[1:] == (1, 5, 5)

    # ---- sample (tiny Linears + reparameterization, plain jnp) -------------
    flat = h.reshape(B, 25)
    e = linear(flat, params["encode_w"], params["encode_b"], act="relu")
    mean_ = linear(e, params["mean_w"], params["mean_b"])
    log_var = linear(e, params["logvar_w"], params["logvar_b"])
    std = jnp.exp(0.5 * log_var)
    n = jax.random.normal(noise_key, std.shape, dtype=std.dtype)
    sample = mean_ + n * std

    # ---- decode_convolutions ------------------------------------------------
    d = linear(sample, params["decode_w"], params["decode_b"], act="relu")
    d = d.reshape(B, 1, 5, 5)
    # d1 / d2 are tiny: plain XLA transposed convs (no Pallas launch).
    d = conv_transpose2d_lax(d, params["d1_w"], params["d1_b"], 2, 3, "relu")
    d = conv_transpose2d_lax(d, params["d2_w"], params["d2_b"], 3, 1, "relu")
    # d3 is the big one: sub-pixel decomposition + Pallas GEMM (exact sigmoid).
    recon = conv_transpose2d_subpixel(
        d, params["d3_w"], params["d3_b"], stride=5,
        act="sigmoid" if sigmoid else "relu")

    return recon, mean_, std


def image_vae_forward_reference(params, x, noise_key, sigmoid=True):
    """Pure-XLA f32 reference (for the numerical self-check)."""
    x = x.astype(jnp.float32)
    B = x.shape[0]
    h = conv2d_lax(x, params["cnn1_w"], params["cnn1_b"], 2, "relu")
    h = maxpool2d_lax(h, 3, 1)
    h = conv2d_lax(h, params["cnn2_w"], params["cnn2_b"], 3, "relu")
    h = maxpool2d_lax(h, 3, 2)
    h = conv2d_lax(h, params["cnn3_w"], params["cnn3_b"], 2, "relu")
    h = maxpool2d_lax(h, 6, 2)
    flat = h.reshape(B, 25)
    e = linear(flat, params["encode_w"], params["encode_b"], act="relu")
    mean_ = linear(e, params["mean_w"], params["mean_b"])
    log_var = linear(e, params["logvar_w"], params["logvar_b"])
    std = jnp.exp(0.5 * log_var)
    n = jax.random.normal(noise_key, std.shape, dtype=std.dtype)
    sample = mean_ + n * std
    d = linear(sample, params["decode_w"], params["decode_b"], act="relu")
    d = d.reshape(B, 1, 5, 5)
    d = conv_transpose2d_lax(d, params["d1_w"], params["d1_b"], 2, 3, "relu")
    d = conv_transpose2d_lax(d, params["d2_w"], params["d2_b"], 3, 1, "relu")
    recon = conv_transpose2d_lax(d, params["d3_w"], params["d3_b"], 5, 1,
                                 "sigmoid" if sigmoid else "relu")
    return recon, mean_, std


if __name__ == "__main__":
    key = jax.random.PRNGKey(0)
    pkey, xkey, nkey = jax.random.split(key, 3)

    params = init_params(pkey)
    # 400x400 is forced by the architecture (encoder must produce 1x5x5).
    x = jax.random.uniform(xkey, (1, 3, 400, 400), jnp.float32)

    fwd = jax.jit(image_vae_forward)
    recon, mean_, std = fwd(params, x, nkey)
    jax.block_until_ready((recon, mean_, std))

    assert recon.shape == (1, 3, 400, 400)
    assert mean_.shape == (1, REP_DIM) and std.shape == (1, REP_DIM)
    assert bool(jnp.isfinite(recon).all())

    # Numerical self-check against the pure-XLA f32 reference (differences are
    # bf16-operand sized; tolerances leave a wide margin).
    r_ref, m_ref, s_ref = jax.jit(image_vae_forward_reference)(params, x, nkey)
    jax.block_until_ready((r_ref, m_ref, s_ref))
    err_r = float(jnp.max(jnp.abs(recon - r_ref)))
    err_m = float(jnp.max(jnp.abs(mean_ - m_ref)))
    err_s = float(jnp.max(jnp.abs(std - s_ref)))
    assert err_r < 5e-2 and err_m < 2e-2 and err_s < 2e-2, (err_r, err_m, err_s)

    print("KERNEL_OK")
</pallas_src>

<mosaic_0001>
module attributes {stable_mosaic.version = 11 : i64} {
  func.func @_roll_probe_kernel(%arg0: memref<8x128xf32, #tpu.memory_space<vmem>>, %arg1: memref<8x128xf32, #tpu.memory_space<vmem>>) attributes {dimension_semantics = [], scalar_prefetch = 0 : i64, scratch_operands = 0 : i64, tpu.core_type = #tpu.core_type<tc>} {
    %c0 = arith.constant 0 : index
    %c0_0 = arith.constant 0 : index
    %0 = vector.load %arg0[%c0, %c0_0] : memref<8x128xf32, #tpu.memory_space<vmem>>, vector<8x128xf32>
    %c1_i32 = arith.constant 1 : i32
    %1 = tpu.dynamic_rotate %0 by %c1_i32 dim 1 : vector<8x128xf32>, i32 -> vector<8x128xf32>
    %c0_1 = arith.constant 0 : index
    %c0_2 = arith.constant 0 : index
    %2 = vector.load %arg1[%c0_1, %c0_2] : memref<8x128xf32, #tpu.memory_space<vmem>>, vector<8x128xf32>
    tpu.vector_store %arg1[%c0_1, %c0_2], %1 {strides = array<i32>} : memref<8x128xf32, #tpu.memory_space<vmem>>, vector<8x128xf32>,
    return
  }
}

</mosaic_0001>

<llo_original>
// kernel: tpu_custom_call.1
$region0: #{tpu_custom_call.1}
  #allocation0 [shape = 'u32[]', space=smem, size = 0x4, offset = 0x4, fixed_abs, tag = 'smem constant byte address 0x4 - core index']
  #allocation1 [shape = 'u32[144,128]{1,0:T(1,128)}', space=vmem, size = 0x12000, scoped, tag = 'internal scratch']
  %s0 = inlined_call_operand.hbm [shape: f32[8,128], index: 0, kind: input, shape index: {}]
  %s1 = inlined_call_operand.hbm [shape: f32[8,128], index: 1, kind: output, shape index: {}]
  %s2 = sld [smem:[#allocation0]]
  $region18: #{tpu_custom_call.1} parent=0
    _
  %s4 = ssub.s32 1, %s2
  %s5 = scalar_select 0, %s4, %s2
  $region1: #{tpu_custom_call.1} parent=0
    #allocation2 [shape = 'u8[4096]{0}', space=vmem, size = 0x1000, scoped, tag = 'input window, operand 0, single buffered']
    #allocation3 [shape = 's32[1]{0}', space=sflag, size = 0x4, scoped, tag = 'scoped memory for tpu_custom_call.1']
    #allocation4 [shape = 's32[1]{0}', space=sflag, size = 0x4, scoped, tag = 'scoped memory for tpu_custom_call.1']
    #allocation5 [shape = 'u8[4096]{0}', space=vmem, size = 0x1000, scoped, tag = 'output window, operand 0, single buffered']
    %6 = vsyncpa [#allocation3], 0
    %7 = vsyncpa [#allocation4], 0
    // Predicated region
    $region2: #{tpu_custom_call.1} parent=1 // pred_check
      _
    $region3: #{tpu_custom_call.1} parent=1 // pred_check_branch
      %9 = sbr.rel (0) target = $region5
    $region4: #{tpu_custom_call.1} parent=1 // pred_region
      %s11 = ssub.s32 128, 128
      %12 = vsyncadd [#allocation3], %s11
      %s14 = sshll.u32 [#allocation2], 4
      %s15 = int_to_ptr.vmem [resolvable:$true] %s14
      %17 = dma.hbm_to_vmem [thread:$0]  %s0, 128, %s15, [#allocation3]
    $region5: #{tpu_custom_call.1} parent=1 // pred_fallthru
      _
    // Predicated region
    $region6: #{tpu_custom_call.1} parent=1 // pred_check
      _
    $region7: #{tpu_custom_call.1} parent=1 // pred_check_branch
      %19 = sbr.rel (0) target = $region9
    $region8: #{tpu_custom_call.1} parent=1 // pred_region
      %20 = dma.done [#allocation3], 128
    $region9: #{tpu_custom_call.1} parent=1 // pred_fallthru
      _
    %v21 = vld [vmem:[#allocation2] sm:$0xff]
    %22 = vrot.lane.b32.xlu0 %v21, 1
    %v23 = vpop.permute.xlu0 %22
    %24 = vst [vmem:[#allocation5] sm:$0xff] %v23
    // Predicated region
    $region10: #{tpu_custom_call.1} parent=1 // pred_check
      _
    $region11: #{tpu_custom_call.1} parent=1 // pred_check_branch
      %26 = sbr.rel (0) target = $region13
    $region12: #{tpu_custom_call.1} parent=1 // pred_region
      %s28 = ssub.s32 128, 128
      %29 = vsyncadd [#allocation4], %s28
      %s31 = sshll.u32 [#allocation5], 4
      %s32 = int_to_ptr.vmem [resolvable:$true] %s31
      %34 = dma.vmem_to_hbm [thread:$0]  %s32, 128, %s1, [#allocation4]
    $region13: #{tpu_custom_call.1} parent=1 // pred_fallthru
      _
    // Predicated region
    $region14: #{tpu_custom_call.1} parent=1 // pred_check
      _
    $region15: #{tpu_custom_call.1} parent=1 // pred_check_branch
      %36 = sbr.rel (0) target = $region17
    $region16: #{tpu_custom_call.1} parent=1 // pred_region
      %37 = dma.done [#allocation4], 128
    $region17: #{tpu_custom_call.1} parent=1 // pred_fallthru
      _
    %38 = vsyncpa [#allocation3], 1
    %39 = vsyncpa [#allocation4], 1

</llo_original>
